<compile_context>
chip_gen: v5e
topology: v5e:2x2
jax: 0.10.0
libtpu: 0.0.40
codegen_flags: <defaults>
</compile_context>

<pallas_src>
import jax
import jax.numpy as jnp
from jax.experimental import pallas as pl
from jax.experimental.pallas import tpu as pltpu

IN_FEATURES = 2
OUT_FEATURES = 2


def linear_sigmoid_permute_kernel(x_ref, w_ref, b_ref, o_ref):
    # x_ref: (N, Fin) f32 in VMEM, N = B*S (natural layout, no wrapper transpose).
    # w_ref: (Fout * Fin,) f32 in SMEM (row-major flattened W).
    # b_ref: (Fout,) f32 in SMEM.
    # o_ref: (Fout, N) f32 in VMEM  -> already the permuted (0,2,1) layout.
    xT = x_ref[...].T  # (Fin, N): tiny in-kernel transpose fuses the permute.

    # K = 2 contraction unrolled on the VPU (MXU skipped on purpose).
    rows = []
    for o in range(OUT_FEATURES):
        y = b_ref[o] + w_ref[o * IN_FEATURES] * xT[0:1, :]
        for f in range(1, IN_FEATURES):
            y = y + w_ref[o * IN_FEATURES + f] * xT[f:f + 1, :]
        rows.append(y)
    y_all = jnp.concatenate(rows, axis=0)  # (Fout, N)

    # sigmoid(y) = 0.5 * (tanh(y/2) + 1): single EUP op, exact in f32.
    o_ref[...] = 0.5 * (jnp.tanh(0.5 * y_all) + 1.0)


@jax.jit
def model_forward(x, weight, bias):
    """x: (B, S, Fin); weight: (Fout, Fin); bias: (Fout,). Returns (B, Fout, S)."""
    B, S, Fin = x.shape
    Fout = weight.shape[0]
    n = B * S

    x2d = x.reshape(n, Fin)        # free reshape; kernel does the transpose
    w_flat = weight.reshape(-1)    # (Fout*Fin,) -> SMEM scalars

    out2d = pl.pallas_call(
        linear_sigmoid_permute_kernel,
        out_shape=jax.ShapeDtypeStruct((Fout, n), x.dtype),
        in_specs=[
            pl.BlockSpec(memory_space=pltpu.MemorySpace.VMEM),   # x2d
            pl.BlockSpec(memory_space=pltpu.MemorySpace.SMEM),   # weights
            pl.BlockSpec(memory_space=pltpu.MemorySpace.SMEM),   # bias
        ],
        out_specs=pl.BlockSpec(memory_space=pltpu.MemorySpace.VMEM),
        cost_estimate=pl.CostEstimate(
            flops=2 * n * Fin * Fout,
            transcendentals=n * Fout,
            bytes_accessed=4 * (n * Fin + Fout * Fin + Fout + Fout * n),
        ),
    )(x2d, w_flat, bias)

    # (Fout, B*S) -> (B, Fout, S); fused inside the jitted program.
    return out2d.reshape(Fout, B, S).transpose(1, 0, 2)


if __name__ == "__main__":
    key = jax.random.PRNGKey(0)
    k_x, k_w, k_b = jax.random.split(key, 3)

    # Input matching the PyTorch module: x1 = torch.randn(1, 2, 2)
    x = jax.random.normal(k_x, (1, 2, 2), dtype=jnp.float32)

    # Deterministic Linear(2, 2) parameters (PyTorch-style uniform init bound).
    bound = 1.0 / (IN_FEATURES ** 0.5)
    weight = jax.random.uniform(
        k_w, (OUT_FEATURES, IN_FEATURES), minval=-bound, maxval=bound,
        dtype=jnp.float32)
    bias = jax.random.uniform(
        k_b, (OUT_FEATURES,), minval=-bound, maxval=bound, dtype=jnp.float32)

    out = jax.block_until_ready(model_forward(x, weight, bias))

    # Pure-JAX reference for correctness.
    ref = jax.nn.sigmoid(jnp.einsum("bsf,of->bso", x, weight) + bias)
    ref = jnp.transpose(ref, (0, 2, 1))
    assert out.shape == (1, OUT_FEATURES, 2)
    assert jnp.allclose(out, ref, atol=1e-6, rtol=1e-6)

    print("KERNEL_OK")
</pallas_src>

<mosaic_0001>
module attributes {stable_mosaic.version = 11 : i64} {
  func.func @linear_sigmoid_permute_kernel(%arg0: memref<2x2xf32, #tpu.memory_space<vmem>>, %arg1: memref<4xf32, #tpu.memory_space<smem>>, %arg2: memref<2xf32, #tpu.memory_space<smem>>, %arg3: memref<2x2xf32, #tpu.memory_space<vmem>>) attributes {dimension_semantics = [], scalar_prefetch = 0 : i64, scratch_operands = 0 : i64, tpu.core_type = #tpu.core_type<tc>} {
    %c0 = arith.constant 0 : index
    %c0_0 = arith.constant 0 : index
    %0 = vector.load %arg0[%c0, %c0_0] : memref<2x2xf32, #tpu.memory_space<vmem>>, vector<2x2xf32>
    %1 = tpu.transpose %0, [1, 0] : vector<2x2xf32> -> vector<2x2xf32>
    %c0_1 = arith.constant 0 : index
    %2 = memref.load %arg2[%c0_1] : memref<2xf32, #tpu.memory_space<smem>>
    %c0_2 = arith.constant 0 : index
    %3 = memref.load %arg1[%c0_2] : memref<4xf32, #tpu.memory_space<smem>>
    %4 = vector.extract_strided_slice %1 {offsets = [0, 0], sizes = [1, 2], strides = [1, 1]} : vector<2x2xf32> to vector<1x2xf32>
    %5 = vector.broadcast %3 : f32 to vector<1x2xf32>
    %6 = arith.mulf %5, %4 : vector<1x2xf32>
    %7 = vector.broadcast %2 : f32 to vector<1x2xf32>
    %8 = arith.addf %7, %6 : vector<1x2xf32>
    %c1 = arith.constant 1 : index
    %9 = memref.load %arg1[%c1] : memref<4xf32, #tpu.memory_space<smem>>
    %10 = vector.extract_strided_slice %1 {offsets = [1, 0], sizes = [1, 2], strides = [1, 1]} : vector<2x2xf32> to vector<1x2xf32>
    %11 = vector.broadcast %9 : f32 to vector<1x2xf32>
    %12 = arith.mulf %11, %10 : vector<1x2xf32>
    %13 = arith.addf %8, %12 : vector<1x2xf32>
    %c1_3 = arith.constant 1 : index
    %14 = memref.load %arg2[%c1_3] : memref<2xf32, #tpu.memory_space<smem>>
    %c2 = arith.constant 2 : index
    %15 = memref.load %arg1[%c2] : memref<4xf32, #tpu.memory_space<smem>>
    %16 = vector.extract_strided_slice %1 {offsets = [0, 0], sizes = [1, 2], strides = [1, 1]} : vector<2x2xf32> to vector<1x2xf32>
    %17 = vector.broadcast %15 : f32 to vector<1x2xf32>
    %18 = arith.mulf %17, %16 : vector<1x2xf32>
    %19 = vector.broadcast %14 : f32 to vector<1x2xf32>
    %20 = arith.addf %19, %18 : vector<1x2xf32>
    %c3 = arith.constant 3 : index
    %21 = memref.load %arg1[%c3] : memref<4xf32, #tpu.memory_space<smem>>
    %22 = vector.extract_strided_slice %1 {offsets = [1, 0], sizes = [1, 2], strides = [1, 1]} : vector<2x2xf32> to vector<1x2xf32>
    %23 = vector.broadcast %21 : f32 to vector<1x2xf32>
    %24 = arith.mulf %23, %22 : vector<1x2xf32>
    %25 = arith.addf %20, %24 : vector<1x2xf32>
    %26 = tpu.concatenate %13, %25 in 0 : vector<1x2xf32>, vector<1x2xf32> -> vector<2x2xf32>
    %cst = arith.constant 5.000000e-01 : f32
    %27 = vector.broadcast %cst : f32 to vector<2x2xf32>
    %28 = arith.mulf %27, %26 : vector<2x2xf32>
    %29 = math.tanh %28 : vector<2x2xf32>
    %cst_4 = arith.constant 1.000000e+00 : f32
    %30 = vector.broadcast %cst_4 : f32 to vector<2x2xf32>
    %31 = arith.addf %29, %30 : vector<2x2xf32>
    %cst_5 = arith.constant 5.000000e-01 : f32
    %32 = vector.broadcast %cst_5 : f32 to vector<2x2xf32>
    %33 = arith.mulf %32, %31 : vector<2x2xf32>
    %c0_6 = arith.constant 0 : index
    %c0_7 = arith.constant 0 : index
    %34 = vector.load %arg3[%c0_6, %c0_7] : memref<2x2xf32, #tpu.memory_space<vmem>>, vector<2x2xf32>
    tpu.vector_store %arg3[%c0_6, %c0_7], %33 {strides = array<i32>} : memref<2x2xf32, #tpu.memory_space<vmem>>, vector<2x2xf32>,
    return
  }
}

</mosaic_0001>

<llo_original>
// kernel: model_forward.1
$region0: #{model_forward.1}
  #allocation0 [shape = 'u32[]', space=smem, size = 0x4, offset = 0x4, fixed_abs, tag = 'smem constant byte address 0x4 - core index']
  #allocation1 [shape = 'u32[72,128]{1,0:T(1,128)}', space=vmem, size = 0x9000, scoped, tag = 'internal scratch']
  %s0 = inlined_call_operand.vmem [shape: f32[2,2], index: 0, kind: input, shape index: {}]
  %s1 = inlined_call_operand.vmem [shape: f32[4], index: 1, kind: input, shape index: {}]
  %s2 = inlined_call_operand.vmem [shape: f32[2], index: 2, kind: input, shape index: {}]
  %s3 = inlined_call_operand.hbm [shape: f32[2,2], index: 3, kind: output, shape index: {}]
  %s4 = sld [smem:[#allocation0]]
  $region30: #{model_forward.1} parent=0
    _
  %s6 = ssub.s32 1, %s4
  %s7 = scalar_select 0, %s6, %s4
  $region1: #{model_forward.1} parent=0
    #allocation2 [shape = 'u8[512]{0}', space=smem, size = 0x200, scoped, tag = 'input window, operand 1, single buffered']
    #allocation3 [shape = 's32[1]{0}', space=sflag, size = 0x4, scoped, tag = 'scoped memory for model_forward.1']
    #allocation4 [shape = 's32[1]{0}', space=sflag, size = 0x4, scoped, tag = 'scoped memory for model_forward.1']
    #allocation5 [shape = 'u8[512]{0}', space=smem, size = 0x200, scoped, tag = 'input window, operand 2, single buffered']
    #allocation6 [shape = 's32[1]{0}', space=sflag, size = 0x4, scoped, tag = 'scoped memory for model_forward.1']
    #allocation7 [shape = 'u8[1024]{0}', space=vmem, size = 0x400, scoped, tag = 'output window, operand 0, single buffered']
    %8 = vsyncpa [#allocation4], 0
    %9 = vsyncpa [#allocation6], 0
    %10 = vsyncpa [#allocation3], 0
    // Predicated region
    $region2: #{model_forward.1} parent=1 // pred_check
      _
    $region3: #{model_forward.1} parent=1 // pred_check_branch
      %12 = sbr.rel (0) target = $region5
    $region4: #{model_forward.1} parent=1 // pred_region
      _
    $region5: #{model_forward.1} parent=1 // pred_fallthru
      _
    // Predicated region
    $region6: #{model_forward.1} parent=1 // pred_check
      _
    $region7: #{model_forward.1} parent=1 // pred_check_branch
      %14 = sbr.rel (0) target = $region9
    $region8: #{model_forward.1} parent=1 // pred_region
      %16 = vsyncadd [#allocation4], 0
      %s18 = sshll.u32 %s1, 4
      %s19 = int_to_ptr.vmem [resolvable:$true] %s18
      %21 = dma.vmem_to_smem %s19, 16, [#allocation2], [#allocation4]
    $region9: #{model_forward.1} parent=1 // pred_fallthru
      _
    // Predicated region
    $region10: #{model_forward.1} parent=1 // pred_check
      _
    $region11: #{model_forward.1} parent=1 // pred_check_branch
      %23 = sbr.rel (0) target = $region13
    $region12: #{model_forward.1} parent=1 // pred_region
      %25 = vsyncadd [#allocation6], 0
      %s27 = sshll.u32 %s2, 4
      %s28 = int_to_ptr.vmem [resolvable:$true] %s27
      %30 = dma.vmem_to_smem %s28, 16, [#allocation5], [#allocation6]
    $region13: #{model_forward.1} parent=1 // pred_fallthru
      _
    // Predicated region
    $region14: #{model_forward.1} parent=1 // pred_check
      _
    $region15: #{model_forward.1} parent=1 // pred_check_branch
      %32 = sbr.rel (0) target = $region17
    $region16: #{model_forward.1} parent=1 // pred_region
      %34 = dma.done [#allocation4], 16
    $region17: #{model_forward.1} parent=1 // pred_fallthru
      _
    // Predicated region
    $region18: #{model_forward.1} parent=1 // pred_check
      _
    $region19: #{model_forward.1} parent=1 // pred_check_branch
      %36 = sbr.rel (0) target = $region21
    $region20: #{model_forward.1} parent=1 // pred_region
      %38 = dma.done [#allocation6], 16
    $region21: #{model_forward.1} parent=1 // pred_fallthru
      _
    %39 = sfence
    %v40 = vld [vmem:[%s0] sm:$0x3]
    %41 = vxpose.xlu0.b32.start [1/16] %v40, 128
    %42 = vxpose.xlu0.b32.cont [2/16] 0.0, 128
    %43 = vxpose.xlu0.b32.cont [3/16] 0.0, 128
    %44 = vxpose.xlu0.b32.cont [4/16] 0.0, 128
    %45 = vxpose.xlu0.b32.cont [5/16] 0.0, 128
    %46 = vxpose.xlu0.b32.cont [6/16] 0.0, 128
    %47 = vxpose.xlu0.b32.cont [7/16] 0.0, 128
    %48 = vxpose.xlu0.b32.cont [8/16] 0.0, 128
    %49 = vxpose.xlu0.b32.cont [9/16] 0.0, 128
    %50 = vxpose.xlu0.b32.cont [10/16] 0.0, 128
    %51 = vxpose.xlu0.b32.cont [11/16] 0.0, 128
    %52 = vxpose.xlu0.b32.cont [12/16] 0.0, 128
    %53 = vxpose.xlu0.b32.cont [13/16] 0.0, 128
    %54 = vxpose.xlu0.b32.cont [14/16] 0.0, 128
    %55 = vxpose.xlu0.b32.cont [15/16] 0.0, 128
    %56 = vxpose.xlu0.b32.end [16/16] 0.0, 128
    %v57 = vpop.trf.xlu0
    %v58 = vpop.trf.xlu0
    %v59 = vpop.trf.xlu0
    %v60 = vpop.trf.xlu0
    %v61 = vpop.trf.xlu0
    %v62 = vpop.trf.xlu0
    %v63 = vpop.trf.xlu0
    %v64 = vpop.trf.xlu0
    %v65 = vpop.trf.xlu0
    %v66 = vpop.trf.xlu0
    %v67 = vpop.trf.xlu0
    %v68 = vpop.trf.xlu0
    %v69 = vpop.trf.xlu0
    %v70 = vpop.trf.xlu0
    %v71 = vpop.trf.xlu0
    %v72 = vpop.trf.xlu0
    %s73 = sld [smem:[#allocation5]]
    %s74 = sld [smem:[#allocation2]]
    %v75 = vstv %s74
    %v76 = vmul.f32 %v75, %v57
    %v77 = vstv %s73
    %v78 = vadd.f32 %v77, %v76
    %s79 = sld [smem:[#allocation2 + $0x1]]
    %v80 = vstv %s79
    %v81 = vmul.f32 %v80, %v57
    %v83 = vrot.slane %v81, 1
    %v85 = vadd.f32 %v78, %v83
    %s86 = sld [smem:[#allocation5 + $0x1]]
    %s87 = sld [smem:[#allocation2 + $0x2]]
    %v88 = vstv %s87
    %v89 = vmul.f32 %v88, %v57
    %v90 = vstv %s86
    %v91 = vadd.f32 %v90, %v89
    %s92 = sld [smem:[#allocation2 + $0x3]]
    %v93 = vstv %s92
    %v94 = vmul.f32 %v93, %v57
    %v96 = vrot.slane %v94, 1
    %v98 = vadd.f32 %v91, %v96
    %v100 = vrot.slane %v98, 7
    %vm102 = vcmask 1040384
    %v103 = vsel %vm102, %v85, %v100
    %v104 = vmul.f32 %v103, 0.5
    %v105 = vtanh.pop %v104
    %v106 = vadd.f32 %v105, 1.0
    %v107 = vmul.f32 %v106, 0.5
    %vm108 = vcmask 9216
    %109 = vst.msk [vmem:[#allocation7] sm:$0x3] %vm108, %v107
    // Predicated region
    $region22: #{model_forward.1} parent=1 // pred_check
      _
    $region23: #{model_forward.1} parent=1 // pred_check_branch
      %111 = sbr.rel (0) target = $region25
    $region24: #{model_forward.1} parent=1 // pred_region
      %113 = vsyncadd [#allocation3], 0
      %s115 = sshll.u32 [#allocation7], 4
      %s116 = int_to_ptr.vmem [resolvable:$true] %s115
      %s117 = sshll.u32 %s3, 4
      %s118 = int_to_ptr.hbm [resolvable:$true] %s117
      %120 = dma.vmem_to_hbm [thread:$0]  %s116, 32, %s118, [#allocation3]
    $region25: #{model_forward.1} parent=1 // pred_fallthru
      _
    // Predicated region
    $region26: #{model_forward.1} parent=1 // pred_check
      _
    $region27: #{model_forward.1} parent=1 // pred_check_branch
      %122 = sbr.rel (0) target = $region29
    $region28: #{model_forward.1} parent=1 // pred_region
      %124 = dma.done [#allocation3], 32
    $region29: #{model_forward.1} parent=1 // pred_fallthru
      _
    %125 = vsyncpa [#allocation3], 1
    %126 = vsyncpa [#allocation4], 1
    %127 = vsyncpa [#allocation6], 1

</llo_original>
